<compile_context>
chip_gen: v7x
topology: tpu7x:2x2x1
jax: 0.10.0
libtpu: 0.0.40
codegen_flags: <defaults>
</compile_context>

<pallas_src>
import functools

import jax
import jax.numpy as jnp
from jax.experimental import pallas as pl
from jax.experimental.pallas import tpu as pltpu

LANE = 128
SUBLANE = 8
NEG_FILL = -1e30  # "minus infinity" for padded class columns (safe in f32 arithmetic)


def _linear_logsoftmax_kernel(x_ref, w_ref, b_ref, o_ref, *, num_classes):
    # (TB, D) @ (D, C_pad) on the MXU with f32 accumulation.
    logits = jnp.dot(x_ref[...], w_ref[...], preferred_element_type=jnp.float32)
    logits = logits + b_ref[...]  # padded columns get NEG_FILL -> exp underflows to 0
    m = jnp.max(logits, axis=-1, keepdims=True)
    z = logits - m
    lse = jnp.log(jnp.sum(jnp.exp(z), axis=-1, keepdims=True))
    # Store only the real classes (masked vst; 40 B/row HBM instead of 512 B/row).
    o_ref[...] = (z - lse)[:, :num_classes].astype(o_ref.dtype)


@functools.partial(jax.jit, static_argnames=("tb",))
def linear_logsoftmax(x, weight, bias, *, tb=None):
    """Forward pass of torch.nn.Linear(input_size, 10) + F.log_softmax(dim=1).

    x:      [B, D] f32
    weight: [C, D] f32  (torch layout)
    bias:   [C]    f32
    returns [B, C] f32 log-probabilities.
    """
    B, D = x.shape
    C = weight.shape[0]
    C_pad = max(LANE, pl.cdiv(C, LANE) * LANE)

    # ---- batch tile selection: VMEM budget only, no artificial row cap ----
    if tb is None:
        budget = 40 * 1024 * 1024                       # safe scoped-VMEM budget on v5e/v6e/v7x
        fixed = 4 * 2 * (D * C_pad + C_pad)             # resident weight + bias (double-buffered)
        per_row = 4 * (2 * D + 2 * C_pad)               # x row + lane-padded out row, x2 buffers
        tb = max(SUBLANE, ((budget - fixed) // per_row) // SUBLANE * SUBLANE)

    if B <= SUBLANE:
        tb = B                                          # single block == full array dims
    else:
        tb = max(SUBLANE, (tb // SUBLANE) * SUBLANE)
        tb = min(tb, (B // SUBLANE) * SUBLANE)          # never exceed the array extent
        if B >= 2 * SUBLANE:
            # Guarantee >= 2 grid steps so both v7x TensorCores get work.
            half = pl.cdiv(pl.cdiv(B, 2), SUBLANE) * SUBLANE
            tb = min(tb, half)

    grid = (pl.cdiv(B, tb),)  # ragged last block: OOB reads are padded, OOB writes dropped

    # ---- weight / bias layout (tiny arrays; classes padded to 128 lanes) ----
    w_p = jnp.zeros((D, C_pad), jnp.float32).at[:, :C].set(weight.T.astype(jnp.float32))
    b_p = jnp.full((1, C_pad), NEG_FILL, jnp.float32).at[0, :C].set(bias.astype(jnp.float32))

    # VMEM: double-buffered x + out tiles, double-buffered resident weight + bias.
    compute_bytes = 4 * 2 * (tb * D + tb * C_pad + D * C_pad + C_pad)
    vmem_limit = int(min(max(compute_bytes + (8 << 20), 32 << 20), 48 << 20))

    cost = pl.CostEstimate(
        flops=2 * B * D * C_pad,
        transcendentals=B * C_pad + B,                   # exp per logit + log per row
        bytes_accessed=4 * (B * D + D * C_pad + C_pad + B * C),
    )

    kernel = functools.partial(_linear_logsoftmax_kernel, num_classes=C)

    return pl.pallas_call(
        kernel,
        out_shape=jax.ShapeDtypeStruct((B, C), jnp.float32),
        grid_spec=pltpu.PrefetchScalarGridSpec(
            num_scalar_prefetch=0,
            grid=grid,
            in_specs=[
                pl.BlockSpec((tb, D), lambda i: (i, 0)),       # x: tiled over batch
                pl.BlockSpec((D, C_pad), lambda i: (0, 0)),    # weight: VMEM-resident
                pl.BlockSpec((1, C_pad), lambda i: (0, 0)),    # bias:   VMEM-resident
            ],
            out_specs=pl.BlockSpec((tb, C), lambda i: (i, 0)),
        ),
        compiler_params=pltpu.CompilerParams(
            dimension_semantics=("parallel",),  # batch rows independent -> both TCs on v7x
            vmem_limit_bytes=vmem_limit,
        ),
        cost_estimate=cost,
    )(x, w_p, b_p)


if __name__ == "__main__":
    key = jax.random.PRNGKey(0)
    k_x, k_w, k_b = jax.random.split(key, 3)

    batch, input_size, num_classes = 8, 32, 10

    x = jax.random.normal(k_x, (batch, input_size), dtype=jnp.float32)
    # Deterministic init mimicking nn.Linear's uniform(-1/sqrt(in), 1/sqrt(in)), torch layout.
    bound = 1.0 / jnp.sqrt(jnp.float32(input_size))
    weight = jax.random.uniform(k_w, (num_classes, input_size), dtype=jnp.float32,
                                minval=-bound, maxval=bound)
    bias = jax.random.uniform(k_b, (num_classes,), dtype=jnp.float32,
                              minval=-bound, maxval=bound)

    out = linear_logsoftmax(x, weight, bias)
    jax.block_until_ready(out)

    # Reference check in plain JAX (matches the PyTorch module's forward).
    ref = jax.nn.log_softmax(x @ weight.T + bias, axis=1)
    assert out.shape == (batch, num_classes)
    assert jnp.allclose(out, ref, atol=1e-5), "mismatch vs reference"
    print("KERNEL_OK")
</pallas_src>

<mosaic_0001>
module attributes {stable_mosaic.version = 11 : i64} {
  func.func @_linear_logsoftmax_kernel(%arg0: i32, %arg1: memref<8x32xf32, #tpu.memory_space<vmem>>, %arg2: memref<32x128xf32, #tpu.memory_space<vmem>>, %arg3: memref<1x128xf32, #tpu.memory_space<vmem>>, %arg4: memref<8x10xf32, #tpu.memory_space<vmem>>) attributes {dimension_semantics = [#tpu.dimension_semantics<parallel>], iteration_bounds = array<i64: 1>, scalar_prefetch = 0 : i64, scratch_operands = 0 : i64, tpu.core_type = #tpu.core_type<tc>, window_params = [{transform_indices = @transform_0, window_bounds = array<i64: 8, 32>}, {pipeline_mode = #tpu.pipeline_mode<synchronous>, transform_indices = @transform_1, window_bounds = array<i64: 32, 128>}, {pipeline_mode = #tpu.pipeline_mode<synchronous>, transform_indices = @transform_2, window_bounds = array<i64: 1, 128>}, {transform_indices = @transform_3, window_bounds = array<i64: 8, 10>}]} {
    %c0 = arith.constant 0 : index
    %c0_0 = arith.constant 0 : index
    %0 = vector.load %arg1[%c0, %c0_0] : memref<8x32xf32, #tpu.memory_space<vmem>>, vector<8x32xf32>
    %c0_1 = arith.constant 0 : index
    %c0_2 = arith.constant 0 : index
    %1 = vector.load %arg2[%c0_1, %c0_2] : memref<32x128xf32, #tpu.memory_space<vmem>>, vector<32x128xf32>
    %cst = arith.constant dense<0.000000e+00> : vector<8x128xf32>
    %2 = tpu.matmul %0, %1, %cst {dimension_numbers = #tpu.dot_dimension_numbers<[1], [0], [0], [1], [0, 0, 1, 1], [], []>} : vector<8x32xf32>, vector<32x128xf32>, vector<8x128xf32> -> vector<8x128xf32>
    %c0_3 = arith.constant 0 : index
    %c0_4 = arith.constant 0 : index
    %3 = vector.load %arg3[%c0_3, %c0_4] : memref<1x128xf32, #tpu.memory_space<vmem>>, vector<1x128xf32>
    %4 = vector.broadcast %3 : vector<1x128xf32> to vector<8x128xf32>
    %5 = arith.addf %2, %4 : vector<8x128xf32>
    %cst_5 = arith.constant dense<0xFF800000> : vector<8xf32>
    %6 = vector.multi_reduction <maximumf>, %5, %cst_5 [1] : vector<8x128xf32> to vector<8xf32>
    %7 = vector.shape_cast %6 : vector<8xf32> to vector<8x1xf32>
    %8 = vector.broadcast %7 : vector<8x1xf32> to vector<8x128xf32>
    %9 = arith.subf %5, %8 : vector<8x128xf32>
    %10 = math.exp %9 : vector<8x128xf32>
    %cst_6 = arith.constant dense<0.000000e+00> : vector<8xf32>
    %11 = vector.multi_reduction <add>, %10, %cst_6 [1] : vector<8x128xf32> to vector<8xf32>
    %12 = vector.shape_cast %11 : vector<8xf32> to vector<8x1xf32>
    %13 = math.log %12 : vector<8x1xf32>
    %14 = vector.broadcast %13 : vector<8x1xf32> to vector<8x128xf32>
    %15 = arith.subf %9, %14 : vector<8x128xf32>
    %16 = vector.extract_strided_slice %15 {offsets = [0, 0], sizes = [8, 10], strides = [1, 1]} : vector<8x128xf32> to vector<8x10xf32>
    %c0_7 = arith.constant 0 : index
    %c0_8 = arith.constant 0 : index
    %17 = vector.load %arg4[%c0_7, %c0_8] : memref<8x10xf32, #tpu.memory_space<vmem>>, vector<8x10xf32>
    tpu.vector_store %arg4[%c0_7, %c0_8], %16 {strides = array<i32>} : memref<8x10xf32, #tpu.memory_space<vmem>>, vector<8x10xf32>,
    return
  }
  func.func @transform_0(%arg0: i32) -> (i32, i32) {
    %c0_i32 = arith.constant 0 : i32
    %c0_i32_0 = arith.constant 0 : i32
    return %arg0, %c0_i32 : i32, i32
  }
  func.func @transform_1(%arg0: i32) -> (i32, i32) {
    %c0_i32 = arith.constant 0 : i32
    %c0_i32_0 = arith.constant 0 : i32
    %c0_i32_1 = arith.constant 0 : i32
    return %c0_i32, %c0_i32_0 : i32, i32
  }
  func.func @transform_2(%arg0: i32) -> (i32, i32) {
    %c0_i32 = arith.constant 0 : i32
    %c0_i32_0 = arith.constant 0 : i32
    %c0_i32_1 = arith.constant 0 : i32
    return %c0_i32, %c0_i32_0 : i32, i32
  }
  func.func @transform_3(%arg0: i32) -> (i32, i32) {
    %c0_i32 = arith.constant 0 : i32
    %c0_i32_0 = arith.constant 0 : i32
    return %arg0, %c0_i32 : i32, i32
  }
}

</mosaic_0001>

<llo_original>
// kernel: linear_logsoftmax.1
$region0: #{linear_logsoftmax.1}
  #allocation0 [shape = 'u32[]', space=smem, size = 0x4, offset = 0x4, fixed_abs, tag = 'smem constant byte address 0x4 - core index']
  #allocation1 [shape = 'u32[144,128]{1,0:T(1,128)}', space=vmem, size = 0x12000, scoped, tag = 'internal scratch']
  %s0 = inlined_call_operand.vmem [shape: f32[8,32], index: 0, kind: input, shape index: {}]
  %s1 = inlined_call_operand.vmem [shape: f32[32,128], index: 1, kind: input, shape index: {}]
  %s2 = inlined_call_operand.vmem [shape: f32[1,128], index: 2, kind: input, shape index: {}]
  %s3 = inlined_call_operand.hbm [shape: f32[8,10], index: 3, kind: output, shape index: {}]
  %s4 = sld [smem:[#allocation0]]
  $region22: #{linear_logsoftmax.1} parent=0
    _
  %s6 = ssub.s32 1, %s4
  %s7 = scalar_select 0, %s6, %s4
  $region1: #{linear_logsoftmax.1} parent=0
    #allocation2 [shape = 'u8[4096]{0}', space=vmem, size = 0x1000, scoped, tag = 'output window, operand 0, single buffered']
    #allocation3 [shape = 's32[1]{0}', space=sflag, size = 0x4, scoped, tag = 'scoped memory for linear_logsoftmax.1']
    %8 = vsyncpa [#allocation3], 0
    // Predicated region
    $region2: #{linear_logsoftmax.1} parent=1 // pred_check
      _
    $region3: #{linear_logsoftmax.1} parent=1 // pred_check_branch
      %10 = sbr.rel (0) target = $region5
    $region4: #{linear_logsoftmax.1} parent=1 // pred_region
      _
    $region5: #{linear_logsoftmax.1} parent=1 // pred_fallthru
      _
    // Predicated region
    $region6: #{linear_logsoftmax.1} parent=1 // pred_check
      _
    $region7: #{linear_logsoftmax.1} parent=1 // pred_check_branch
      %12 = sbr.rel (0) target = $region9
    $region8: #{linear_logsoftmax.1} parent=1 // pred_region
      _
    $region9: #{linear_logsoftmax.1} parent=1 // pred_fallthru
      _
    // Predicated region
    $region10: #{linear_logsoftmax.1} parent=1 // pred_check
      _
    $region11: #{linear_logsoftmax.1} parent=1 // pred_check_branch
      %14 = sbr.rel (0) target = $region13
    $region12: #{linear_logsoftmax.1} parent=1 // pred_region
      _
    $region13: #{linear_logsoftmax.1} parent=1 // pred_fallthru
      _
    %v15 = vld [vmem:[%s0] sm:$0xff]
    %v16 = vld [vmem:[%s1] sm:$0xff]
    %v17 = vld [vmem:[%s1 + $0x8] sm:$0xff]
    %v18 = vld [vmem:[%s1 + $0x10] sm:$0xff]
    %v19 = vld [vmem:[%s1 + $0x18] sm:$0xff]
    %v20 = vld [vmem:[%s2] sm:$0x1]
    %v22 = vlaneseq
    %v23 = vshrl.u32 %v22, 7
    %v24 = vsub.s32 0, %v23
    %v25 = vrot.slane %v20, %v24
    %vm27 = vcmask 261120
    %v29 = vsel %vm27, %v15, 0
    %31 = vmatprep.subr.mxu0 0.0
    %32 = vmatpush1.msra.mxu0 %v16
    %33 = vmatprep.subr.mxu0 0.0
    %34 = vmatpush1.msra.mxu0 %v17
    %35 = vmatprep.subr.mxu0 0.0
    %36 = vmatpush1.msra.mxu0 %v18
    %37 = vmatprep.subr.mxu0 0.0
    %38 = vmatpush1.msra.mxu0 %v19
    %39 = vmatprep.subr.mxu0 0.0
    %40 = vmatpush1.msra.mxu0 0.0
    %41 = vmatprep.subr.mxu0 0.0
    %42 = vmatpush1.msra.mxu0 0.0
    %43 = vmatprep.subr.mxu0 0.0
    %44 = vmatpush1.msra.mxu0 0.0
    %45 = vmatprep.subr.mxu0 0.0
    %46 = vmatpush1.msra.mxu0 0.0
    %47 = vmatprep.subr.mxu0 0.0
    %48 = vmatpush1.msra.mxu0 0.0
    %49 = vmatprep.subr.mxu0 0.0
    %50 = vmatpush1.msra.mxu0 0.0
    %51 = vmatprep.subr.mxu0 0.0
    %52 = vmatpush1.msra.mxu0 0.0
    %53 = vmatprep.subr.mxu0 0.0
    %54 = vmatpush1.msra.mxu0 0.0
    %55 = vmatprep.subr.mxu0 0.0
    %56 = vmatpush1.msra.mxu0 0.0
    %57 = vmatprep.subr.mxu0 0.0
    %58 = vmatpush1.msra.mxu0 0.0
    %59 = vmatprep.subr.mxu0 0.0
    %60 = vmatpush1.msra.mxu0 0.0
    %61 = vmatprep.subr.mxu0 0.0
    %62 = vmatpush1.msra.mxu0 0.0
    %63 = vmatprep.subr.mxu0 0.0
    %64 = vmatpush1.msra.mxu0 0.0
    %65 = vmatprep.subr.mxu0 0.0
    %66 = vmatpush1.msra.mxu0 0.0
    %67 = vmatprep.subr.mxu0 0.0
    %68 = vmatpush1.msra.mxu0 0.0
    %69 = vmatprep.subr.mxu0 0.0
    %70 = vmatpush1.msra.mxu0 0.0
    %71 = vmatprep.subr.mxu0 0.0
    %72 = vmatpush1.msra.mxu0 0.0
    %73 = vmatprep.subr.mxu0 0.0
    %74 = vmatpush1.msra.mxu0 0.0
    %75 = vmatprep.subr.mxu0 0.0
    %76 = vmatpush1.msra.mxu0 0.0
    %77 = vmatprep.subr.mxu0 0.0
    %78 = vmatpush1.msra.mxu0 0.0
    %79 = vmatprep.subr.mxu0 0.0
    %80 = vmatpush1.msra.mxu0 0.0
    %81 = vmatprep.subr.mxu0 0.0
    %82 = vmatpush1.msra.mxu0 0.0
    %83 = vmatprep.subr.mxu0 0.0
    %84 = vmatpush1.msra.mxu0 0.0
    %85 = vmatprep.subr.mxu0 0.0
    %86 = vmatpush1.msra.mxu0 0.0
    %87 = vmatprep.subr.mxu0 0.0
    %88 = vmatpush1.msra.mxu0 0.0
    %89 = vmatprep.subr.mxu0 0.0
    %90 = vmatpush1.msra.mxu0 0.0
    %91 = vmatprep.subr.mxu0 0.0
    %92 = vmatpush1.msra.mxu0 0.0
    %93 = vmatprep.subr.mxu0 0.0
    %94 = vmatpush1.msra.mxu0 0.0
    %95 = vmatprep.mubr.f32.mxu0 0.0
    %96 = vmatmul.mubr.f32.gmra.mrb[0].mxu0 %v29
    %v97 = vpop.f32.mrb[0].mxu0
    %v98 = vadd.f32 %v25, %v97
    %v99 = vpop.f32.mrb[0].mxu0
    %100 = vdwg.mxu0
    %101 = vmax.xlane.f32.xlu0 %v98
    %v102 = vpop.xlane.xlu0 %101
    %v103 = vsub.f32 %v98, %v102
    %v104 = vmul.f32 %v103, 1.442695
    %v105 = vpow.pop %v104
    %106 = vadd.xlane.f32.xlu0 %v105
    %v107 = vpop.xlane.xlu0 %106
    %v108 = vlog2.pop %v107
    %v109 = vmul.f32 %v108, 0.6931472
    %v110 = vsub.f32 %v103, %v109
    %vm111 = vcmask 80896
    %112 = vst.msk [vmem:[#allocation2] sm:$0xff] %vm111, %v110
    // Predicated region
    $region14: #{linear_logsoftmax.1} parent=1 // pred_check
      _
    $region15: #{linear_logsoftmax.1} parent=1 // pred_check_branch
      %114 = sbr.rel (0) target = $region17
    $region16: #{linear_logsoftmax.1} parent=1 // pred_region
      %s116 = ssub.s32 128, 128
      %117 = vsyncadd [#allocation3], %s116
      %s119 = sshll.u32 [#allocation2], 4
      %s120 = int_to_ptr.vmem [resolvable:$true] %s119
      %122 = dma.vmem_to_hbm [thread:$0]  %s120, 128, %s3, [#allocation3]
    $region17: #{linear_logsoftmax.1} parent=1 // pred_fallthru
      _
    // Predicated region
    $region18: #{linear_logsoftmax.1} parent=1 // pred_check
      _
    $region19: #{linear_logsoftmax.1} parent=1 // pred_check_branch
      %124 = sbr.rel (0) target = $region21
    $region20: #{linear_logsoftmax.1} parent=1 // pred_region
      %125 = dma.done [#allocation3], 128
    $region21: #{linear_logsoftmax.1} parent=1 // pred_fallthru
      _
    %126 = vsyncpa [#allocation3], 1

</llo_original>
